<compile_context>
chip_gen: v5e
topology: v5e:2x2
jax: 0.10.0
libtpu: 0.0.40
codegen_flags: <defaults>
</compile_context>

<pallas_src>
import jax
import jax.numpy as jnp
from jax.experimental import pallas as pl
from jax.experimental.pallas import tpu as pltpu


# ----------------------------------------------------------------------------
# Primary path: zero-copy identity via input/output buffer aliasing.
# ----------------------------------------------------------------------------
def _hax_alias_kernel(x_ref, o_ref):
    # Output buffer IS the input buffer (input_output_aliases={0: 0}), so
    # nothing moves.  touch() pins a read/write dependency so the aliased
    # output is considered "produced" by this kernel.
    del x_ref  # unused: output aliases input
    pltpu.touch(o_ref)


def _hax_alias_impl(x):
    return pl.pallas_call(
        _hax_alias_kernel,
        out_shape=jax.ShapeDtypeStruct(x.shape, x.dtype),
        in_specs=[pl.BlockSpec(memory_space=pl.ANY)],
        out_specs=pl.BlockSpec(memory_space=pl.ANY),
        input_output_aliases={0: 0},
    )(x)


# ----------------------------------------------------------------------------
# Fallback path: lane-dense, large-tile VMEM copy (only used if the alias
# path cannot be lowered on the current backend).
# ----------------------------------------------------------------------------
def _copy_kernel(x_ref, o_ref):
    o_ref[...] = x_ref[...]


_LANE_COLS = 2048  # lane-dense column width (multiple of 128)


def _hax_copy_impl(x):
    orig_shape = x.shape
    flat = x.reshape(-1)
    n = flat.shape[0]
    tc = _LANE_COLS

    # Pad only a tiny 1-D tail so the buffer reshapes to (rows, tc) with rows
    # a multiple of 8.  No full-tensor 2-D pad / unpad.
    pad = (-n) % (8 * tc)
    if pad:
        flat = jnp.concatenate([flat, jnp.zeros((pad,), flat.dtype)])
    rows = flat.shape[0] // tc
    x2 = flat.reshape(rows, tc)

    # Largest row-tile (<=512) that evenly divides rows: (512, 2048) f32 is a
    # 4 MiB block; in+out double-buffered ~16 MiB, safe on v5e/v6e/v7x.
    tr = rows
    for cand in (512, 256, 128, 64, 32, 16, 8):
        if rows % cand == 0:
            tr = cand
            break
    grid = (rows // tr,)

    out2 = pl.pallas_call(
        _copy_kernel,
        out_shape=jax.ShapeDtypeStruct((rows, tc), x.dtype),
        grid_spec=pltpu.PrefetchScalarGridSpec(
            num_scalar_prefetch=0,
            grid=grid,
            in_specs=[pl.BlockSpec((tr, tc), lambda i: (i, 0))],
            out_specs=pl.BlockSpec((tr, tc), lambda i: (i, 0)),
        ),
        compiler_params=pltpu.CompilerParams(
            dimension_semantics=("parallel",),
            vmem_limit_bytes=32 * 1024 * 1024,
        ),
    )(x2)

    out = out2.reshape(-1)
    if pad:
        out = out[:n]
    return out.reshape(orig_shape)


# ----------------------------------------------------------------------------
# Public forward: identity.
# ----------------------------------------------------------------------------
_hax_alias = jax.jit(_hax_alias_impl)
_hax_copy = jax.jit(_hax_copy_impl)
_USE_ALIAS_PATH = True


def hax_forward(x):
    """Identity forward of _Hax, implemented as a zero-copy Pallas kernel."""
    global _USE_ALIAS_PATH
    if _USE_ALIAS_PATH:
        try:
            return _hax_alias(x)
        except Exception:  # pragma: no cover - lowering fallback
            _USE_ALIAS_PATH = False
    return _hax_copy(x)


if __name__ == "__main__":
    key = jax.random.PRNGKey(0)
    # NCHW-style input consistent with the surrounding model: batch=2,
    # channels=4, 16x16 spatial.
    x = jax.random.normal(key, (2, 4, 16, 16), dtype=jnp.float32)

    y = hax_forward(x)
    y = jax.block_until_ready(y)

    assert y.shape == x.shape and y.dtype == x.dtype
    assert bool(jnp.all(y == x))
    print("KERNEL_OK")
</pallas_src>

<mosaic_0001>
module attributes {stable_mosaic.version = 11 : i64} {
  func.func @_hax_alias_kernel(%arg0: memref<2x4x16x16xf32, #tpu.memory_space<any>>, %arg1: memref<2x4x16x16xf32, #tpu.memory_space<any>>) attributes {dimension_semantics = [], scalar_prefetch = 0 : i64, scratch_operands = 0 : i64, tpu.core_type = #tpu.core_type<tc>} {
    return
  }
}

module attributes {stable_mosaic.version = 11 : i64} {
  func.func @_copy_kernel(%arg0: i32, %arg1: memref<8x2048xf32, #tpu.memory_space<vmem>>, %arg2: memref<8x2048xf32, #tpu.memory_space<vmem>>) attributes {dimension_semantics = [#tpu.dimension_semantics<parallel>], iteration_bounds = array<i64: 1>, scalar_prefetch = 0 : i64, scratch_operands = 0 : i64, tpu.core_type = #tpu.core_type<tc>, window_params = [{transform_indices = @transform_0, window_bounds = array<i64: 8, 2048>}, {transform_indices = @transform_1, window_bounds = array<i64: 8, 2048>}]} {
    %c0 = arith.constant 0 : index
    %c0_0 = arith.constant 0 : index
    %0 = vector.load %arg1[%c0, %c0_0] : memref<8x2048xf32, #tpu.memory_space<vmem>>, vector<8x2048xf32>
    %c0_1 = arith.constant 0 : index
    %c0_2 = arith.constant 0 : index
    %1 = vector.load %arg2[%c0_1, %c0_2] : memref<8x2048xf32, #tpu.memory_space<vmem>>, vector<8x2048xf32>
    tpu.vector_store %arg2[%c0_1, %c0_2], %0 {strides = array<i32>} : memref<8x2048xf32, #tpu.memory_space<vmem>>, vector<8x2048xf32>,
    return
  }
  func.func @transform_0(%arg0: i32) -> (i32, i32) {
    %c0_i32 = arith.constant 0 : i32
    %c0_i32_0 = arith.constant 0 : i32
    return %arg0, %c0_i32 : i32, i32
  }
  func.func @transform_1(%arg0: i32) -> (i32, i32) {
    %c0_i32 = arith.constant 0 : i32
    %c0_i32_0 = arith.constant 0 : i32
    return %arg0, %c0_i32 : i32, i32
  }
}

</mosaic_0001>

<llo_original>
// kernel: _hax_alias_impl.1
$region0: #{_hax_alias_impl.1}
  #allocation0 [shape = 'u32[]', space=smem, size = 0x4, offset = 0x4, fixed_abs, tag = 'smem constant byte address 0x4 - core index']
  #allocation1 [shape = 'u32[72,128]{1,0:T(1,128)}', space=vmem, size = 0x9000, scoped, tag = 'internal scratch']
  %s0 = inlined_call_operand.hbm [shape: f32[2,4,16,16], index: 0, kind: input, shape index: {}, may-alias: {0,1}]
  %s1 = inlined_call_operand.hbm [shape: f32[2,4,16,16], index: 1, kind: output, shape index: {}, may-alias: {0,1}]
  %s2 = sld [smem:[#allocation0]]
  $region2: #{_hax_alias_impl.1} parent=0
    _
  %s4 = ssub.s32 1, %s2
  %s5 = scalar_select 0, %s4, %s2

// kernel: _hax_copy_impl.1
$region0: #{_hax_copy_impl.1}
  #allocation0 [shape = 'u32[]', space=smem, size = 0x4, offset = 0x4, fixed_abs, tag = 'smem constant byte address 0x4 - core index']
  #allocation1 [shape = 'u32[72,128]{1,0:T(1,128)}', space=vmem, size = 0x9000, scoped, tag = 'internal scratch']
  %s0 = inlined_call_operand.vmem [shape: f32[8,2048], index: 0, kind: input, shape index: {}]
  %s1 = inlined_call_operand.vmem [shape: f32[8,2048], index: 1, kind: output, shape index: {}]
  %s2 = sld [smem:[#allocation0]]
  $region14: #{_hax_copy_impl.1} parent=0
    _
  %s4 = ssub.s32 1, %s2
  %s5 = scalar_select 0, %s4, %s2
  // Predicated region
  $region2: #{_hax_copy_impl.1} parent=0 // pred_check
    _
  $region3: #{_hax_copy_impl.1} parent=0 // pred_check_branch
    %7 = sbr.rel (0) target = $region5
  $region4: #{_hax_copy_impl.1} parent=0 // pred_region
    _
  $region5: #{_hax_copy_impl.1} parent=0 // pred_fallthru
    _
  %v8 = vld [vmem:[%s0] sm:$0xff]
  %v9 = vld [vmem:[%s0 + $0x8] sm:$0xff]
  %v10 = vld [vmem:[%s0 + $0x10] sm:$0xff]
  %v11 = vld [vmem:[%s0 + $0x18] sm:$0xff]
  %v12 = vld [vmem:[%s0 + $0x20] sm:$0xff]
  %v13 = vld [vmem:[%s0 + $0x28] sm:$0xff]
  %v14 = vld [vmem:[%s0 + $0x30] sm:$0xff]
  %v15 = vld [vmem:[%s0 + $0x38] sm:$0xff]
  %v16 = vld [vmem:[%s0 + $0x40] sm:$0xff]
  %v17 = vld [vmem:[%s0 + $0x48] sm:$0xff]
  %v18 = vld [vmem:[%s0 + $0x50] sm:$0xff]
  %v19 = vld [vmem:[%s0 + $0x58] sm:$0xff]
  %v20 = vld [vmem:[%s0 + $0x60] sm:$0xff]
  %v21 = vld [vmem:[%s0 + $0x68] sm:$0xff]
  %v22 = vld [vmem:[%s0 + $0x70] sm:$0xff]
  %v23 = vld [vmem:[%s0 + $0x78] sm:$0xff]
  %24 = vst [vmem:[%s1] sm:$0xff] %v8
  %25 = vst [vmem:[%s1 + $0x8] sm:$0xff] %v9
  %26 = vst [vmem:[%s1 + $0x10] sm:$0xff] %v10
  %27 = vst [vmem:[%s1 + $0x18] sm:$0xff] %v11
  %28 = vst [vmem:[%s1 + $0x20] sm:$0xff] %v12
  %29 = vst [vmem:[%s1 + $0x28] sm:$0xff] %v13
  %30 = vst [vmem:[%s1 + $0x30] sm:$0xff] %v14
  %31 = vst [vmem:[%s1 + $0x38] sm:$0xff] %v15
  %32 = vst [vmem:[%s1 + $0x40] sm:$0xff] %v16
  %33 = vst [vmem:[%s1 + $0x48] sm:$0xff] %v17
  %34 = vst [vmem:[%s1 + $0x50] sm:$0xff] %v18
  %35 = vst [vmem:[%s1 + $0x58] sm:$0xff] %v19
  %36 = vst [vmem:[%s1 + $0x60] sm:$0xff] %v20
  %37 = vst [vmem:[%s1 + $0x68] sm:$0xff] %v21
  %38 = vst [vmem:[%s1 + $0x70] sm:$0xff] %v22
  %39 = vst [vmem:[%s1 + $0x78] sm:$0xff] %v23
  // Predicated region
  $region6: #{_hax_copy_impl.1} parent=0 // pred_check
    _
  $region7: #{_hax_copy_impl.1} parent=0 // pred_check_branch
    %41 = sbr.rel (0) target = $region9
  $region8: #{_hax_copy_impl.1} parent=0 // pred_region
    _
  $region9: #{_hax_copy_impl.1} parent=0 // pred_fallthru
    _
  // Predicated region
  $region10: #{_hax_copy_impl.1} parent=0 // pred_check
    _
  $region11: #{_hax_copy_impl.1} parent=0 // pred_check_branch
    %43 = sbr.rel (0) target = $region13
  $region12: #{_hax_copy_impl.1} parent=0 // pred_region
    _
  $region13: #{_hax_copy_impl.1} parent=0 // pred_fallthru
    _

</llo_original>
